<compile_context>
chip_gen: v7x
topology: tpu7x:2x2x1
jax: 0.10.0
libtpu: 0.0.40
codegen_flags: <defaults>
</compile_context>

<pallas_src>
import jax
import jax.numpy as jnp
from jax import lax
from jax.experimental import pallas as pl
from jax.experimental.pallas import tpu as pltpu


def _round_up(x: int, m: int) -> int:
    return (x + m - 1) // m * m


def _cdiv(a: int, b: int) -> int:
    return (a + b - 1) // b


# --------------------------------------------------------------------------
# Fast path: both tables resident in VMEM, gather = one-hot matmul on the MXU.
# --------------------------------------------------------------------------
def _gmf_vmem_kernel(u_idx_ref, v_idx_ref, u_tbl_ref, v_tbl_ref, out_ref):
    blk = out_ref.shape[0]
    nu = u_tbl_ref.shape[0]
    ni = v_tbl_ref.shape[0]

    u_ids = u_idx_ref[...]                      # (blk, 1) int32
    v_ids = v_idx_ref[...]                      # (blk, 1) int32

    # Exact one-hot selection matrices (0.0 / 1.0), built on the VPU.
    u_oh = (u_ids == lax.broadcasted_iota(jnp.int32, (blk, nu), 1)
            ).astype(u_tbl_ref.dtype)
    v_oh = (v_ids == lax.broadcasted_iota(jnp.int32, (blk, ni), 1)
            ).astype(v_tbl_ref.dtype)

    # Row gather as an MXU matmul against the VMEM-resident tables.
    u_rows = jnp.dot(u_oh, u_tbl_ref[...], preferred_element_type=jnp.float32)
    v_rows = jnp.dot(v_oh, v_tbl_ref[...], preferred_element_type=jnp.float32)

    out_ref[...] = (u_rows * v_rows).astype(out_ref.dtype)


# --------------------------------------------------------------------------
# Fallback path: tables stay in HBM, per-row gather DMAs with cross-step
# double buffering and a single aggregate wait per table per tile.
# --------------------------------------------------------------------------
def _make_gather_kernel(blk: int, unroll: int):
    def kernel(u_idx_ref, v_idx_ref, u_tbl_hbm, v_tbl_hbm, out_ref,
               u_buf, v_buf, sems):
        # u_buf / v_buf: (2, blk, E) VMEM double buffers; sems: DMA (2, 2).
        i = pl.program_id(0)
        nsteps = pl.num_programs(0)
        slot = i % 2

        def issue(step, slot_):
            base = step * blk

            @pl.loop(0, blk // unroll)
            def _issue_group(g):
                r0 = pl.multiple_of(g * unroll, unroll)
                for j in range(unroll):          # static unroll: keeps the
                    r = r0 + j                   # descriptor-issue slots fed
                    uidx = u_idx_ref[base + r]
                    vidx = v_idx_ref[base + r]
                    pltpu.make_async_copy(
                        u_tbl_hbm.at[pl.ds(uidx, 1)],
                        u_buf.at[slot_, pl.ds(r, 1)],
                        sems.at[0, slot_]).start()
                    pltpu.make_async_copy(
                        v_tbl_hbm.at[pl.ds(vidx, 1)],
                        v_buf.at[slot_, pl.ds(r, 1)],
                        sems.at[1, slot_]).start()

        # Prime the pipeline on the very first tile.
        @pl.when(i == 0)
        def _prime():
            issue(0, 0)

        # Prefetch the NEXT tile's gathers into the other slot before waiting
        # on this tile -> random-HBM latency overlaps previous tile's work.
        @pl.when(i + 1 < nsteps)
        def _prefetch_next():
            issue(i + 1, 1 - slot)

        # One aggregate wait per table: all blk row copies of shape (1, E)
        # signal the same DMA semaphore; a single descriptor covering the full
        # (blk, E) slot waits for exactly blk * E * itemsize bytes.
        pltpu.make_async_copy(u_buf.at[slot], u_buf.at[slot],
                              sems.at[0, slot]).wait()
        pltpu.make_async_copy(v_buf.at[slot], v_buf.at[slot],
                              sems.at[1, slot]).wait()

        # Multiply in the table dtype (native bf16 VALU on v6e/v7x).
        out_ref[...] = (u_buf[slot] * v_buf[slot]).astype(out_ref.dtype)

    return kernel


# --------------------------------------------------------------------------
# Wrapper
# --------------------------------------------------------------------------
def gmf_forward(u_idx, v_idx, u_table, v_table, *, block_rows: int = 512,
                force_hbm_gather: bool = False):
    """u_idx, v_idx: int (B,); u_table: (num_user, E); v_table: (num_item, E)."""
    batch = int(u_idx.shape[0])
    nu, emb_dim = u_table.shape
    ni, emb_dim_v = v_table.shape
    assert emb_dim == emb_dim_v, "embedding dims must match"
    out_dtype = jnp.result_type(u_table.dtype, v_table.dtype)
    u_isz = jnp.dtype(u_table.dtype).itemsize
    v_isz = jnp.dtype(v_table.dtype).itemsize
    o_isz = jnp.dtype(out_dtype).itemsize

    # Clamp indices so every table access / gather DMA is provably in-bounds.
    u_idx = jnp.clip(u_idx.astype(jnp.int32), 0, nu - 1)
    v_idx = jnp.clip(v_idx.astype(jnp.int32), 0, ni - 1)

    # ---- generation-aware VMEM budget (64 MiB physical on v7x, 128 MiB on
    #      v5e/v6e); fall back conservatively if the query is unavailable.
    try:
        vmem_cap = int(pltpu.get_tpu_info().vmem_capacity_bytes)
    except Exception:
        vmem_cap = 64 << 20

    table_bytes = nu * emb_dim * u_isz + ni * emb_dim * v_isz
    use_fast = (not force_hbm_gather
                and max(nu, ni) <= 4096                 # one-hot gather stays cheap
                and 2 * table_bytes + (8 << 20) <= (3 * vmem_cap) // 4)

    # ---- batch tiling: even, 16-row-aligned tiles (minimal padding).
    if use_fast:
        # Cap the tile so each (blk, n_rows) one-hot operand stays <= 512 KiB.
        onehot_cap = max(16, ((512 << 10) // (4 * max(nu, ni))) // 16 * 16)
        blk_cap = max(16, min(block_rows, onehot_cap))
    else:
        blk_cap = max(16, block_rows)
    n_tiles = _cdiv(batch, blk_cap)
    blk = _round_up(_cdiv(batch, n_tiles), 16)
    # Prefer >= 2 grid steps when it adds no padding, so both v7x TCs get work.
    if _round_up(batch, blk) // blk < 2 and blk % 32 == 0:
        blk //= 2
    batch_pad = _round_up(batch, blk)
    grid = (batch_pad // blk,)
    if batch_pad != batch:
        pad = batch_pad - batch
        u_idx = jnp.pad(u_idx, (0, pad))   # pad rows select row 0; sliced off below
        v_idx = jnp.pad(v_idx, (0, pad))

    if use_fast:
        # Budget: BlockSpec operands are (up to) double buffered.
        fast_need = 2 * (table_bytes + blk * emb_dim * o_isz + 2 * blk * 4) + (2 << 20)
        vmem_limit = min(int(0.85 * vmem_cap),
                         max(32 << 20, fast_need + (8 << 20)))
        out = pl.pallas_call(
            _gmf_vmem_kernel,
            out_shape=jax.ShapeDtypeStruct((batch_pad, emb_dim), out_dtype),
            grid=grid,
            in_specs=[
                pl.BlockSpec((blk, 1), lambda i: (i, 0)),       # user ids
                pl.BlockSpec((blk, 1), lambda i: (i, 0)),       # item ids
                pl.BlockSpec((nu, emb_dim), lambda i: (0, 0)),  # whole table, fetched once
                pl.BlockSpec((ni, emb_dim), lambda i: (0, 0)),  # whole table, fetched once
            ],
            out_specs=pl.BlockSpec((blk, emb_dim), lambda i: (i, 0)),
            compiler_params=pltpu.CompilerParams(
                dimension_semantics=("parallel",),              # independent tiles
                vmem_limit_bytes=int(vmem_limit),
            ),
        )(u_idx.reshape(batch_pad, 1), v_idx.reshape(batch_pad, 1),
          u_table, v_table)
    else:
        # TODO(synk): a VMEM-resident dynamic-index gather for mid-size tables
        # (too big for cheap one-hot, small enough for VMEM) could sit between
        # the two paths; the HBM DMA gather below is the general fallback.
        unroll = 8 if blk % 8 == 0 else 1
        grid_spec = pltpu.PrefetchScalarGridSpec(
            num_scalar_prefetch=2,                     # u_idx, v_idx -> SMEM
            grid=grid,
            in_specs=[
                pl.BlockSpec(memory_space=pl.ANY),     # u_table stays in HBM
                pl.BlockSpec(memory_space=pl.ANY),     # v_table stays in HBM
            ],
            out_specs=pl.BlockSpec((blk, emb_dim), lambda i, ui, vi: (i, 0)),
            scratch_shapes=[
                pltpu.VMEM((2, blk, emb_dim), u_table.dtype),  # double-buffered rows
                pltpu.VMEM((2, blk, emb_dim), v_table.dtype),
                pltpu.SemaphoreType.DMA((2, 2)),               # (table, slot)
            ],
        )
        out = pl.pallas_call(
            _make_gather_kernel(blk, unroll),
            out_shape=jax.ShapeDtypeStruct((batch_pad, emb_dim), out_dtype),
            grid_spec=grid_spec,
            compiler_params=pltpu.CompilerParams(
                # Cross-step double buffering carries state between grid steps,
                # so the batch axis must NOT be split across cores.
                dimension_semantics=("arbitrary",),
            ),
        )(u_idx, v_idx, u_table, v_table)

    return out[:batch]


if __name__ == "__main__":
    # Small synthetic shapes consistent with the module's forward.
    num_user, num_item, emb_dim = 16, 24, 32

    key = jax.random.PRNGKey(0)
    k_u, k_v, k_ui, k_vi, k_ui2, k_vi2 = jax.random.split(key, 6)

    # Deterministic "embedding" parameters (nn.Embedding default: N(0, 1)).
    u_table = jax.random.normal(k_u, (num_user, emb_dim), dtype=jnp.float32)
    v_table = jax.random.normal(k_v, (num_item, emb_dim), dtype=jnp.float32)

    # --- test 1: default call (table-resident fast path), batch=10 ----------
    batch = 10
    u_idx = jax.random.randint(k_ui, (batch,), 0, num_user, dtype=jnp.int32)
    v_idx = jax.random.randint(k_vi, (batch,), 0, num_item, dtype=jnp.int32)
    ref = u_table[u_idx] * v_table[v_idx]
    out = jax.block_until_ready(gmf_forward(u_idx, v_idx, u_table, v_table))
    assert out.shape == (batch, emb_dim)
    assert jnp.allclose(out, ref, atol=1e-6, rtol=1e-6)

    # --- test 2: fast path with a multi-tile grid ---------------------------
    batch2 = 40
    u_idx2 = jax.random.randint(k_ui2, (batch2,), 0, num_user, dtype=jnp.int32)
    v_idx2 = jax.random.randint(k_vi2, (batch2,), 0, num_item, dtype=jnp.int32)
    ref2 = u_table[u_idx2] * v_table[v_idx2]
    out2 = jax.block_until_ready(
        gmf_forward(u_idx2, v_idx2, u_table, v_table, block_rows=16))
    assert jnp.allclose(out2, ref2, atol=1e-6, rtol=1e-6)

    # --- test 3: HBM-gather fallback (multi-tile: exercises priming, the
    #     cross-step prefetch and the aggregate per-table waits) -------------
    out3 = jax.block_until_ready(
        gmf_forward(u_idx2, v_idx2, u_table, v_table, block_rows=16,
                    force_hbm_gather=True))
    assert jnp.allclose(out3, ref2, atol=1e-6, rtol=1e-6)

    print("KERNEL_OK")
</pallas_src>

<mosaic_0001>
module attributes {stable_mosaic.version = 11 : i64} {
  func.func @_gmf_vmem_kernel(%arg0: i32, %arg1: memref<16x1xi32, #tpu.memory_space<vmem>>, %arg2: memref<16x1xi32, #tpu.memory_space<vmem>>, %arg3: memref<16x32xf32, #tpu.memory_space<vmem>>, %arg4: memref<24x32xf32, #tpu.memory_space<vmem>>, %arg5: memref<16x32xf32, #tpu.memory_space<vmem>>) attributes {dimension_semantics = [#tpu.dimension_semantics<parallel>], iteration_bounds = array<i64: 1>, scalar_prefetch = 0 : i64, scratch_operands = 0 : i64, tpu.core_type = #tpu.core_type<tc>, window_params = [{transform_indices = @transform_0, window_bounds = array<i64: 16, 1>}, {transform_indices = @transform_1, window_bounds = array<i64: 16, 1>}, {pipeline_mode = #tpu.pipeline_mode<synchronous>, transform_indices = @transform_2, window_bounds = array<i64: 16, 32>}, {pipeline_mode = #tpu.pipeline_mode<synchronous>, transform_indices = @transform_3, window_bounds = array<i64: 24, 32>}, {transform_indices = @transform_4, window_bounds = array<i64: 16, 32>}]} {
    %c0 = arith.constant 0 : index
    %c0_0 = arith.constant 0 : index
    %0 = vector.load %arg1[%c0, %c0_0] : memref<16x1xi32, #tpu.memory_space<vmem>>, vector<16x1xi32>
    %c0_1 = arith.constant 0 : index
    %c0_2 = arith.constant 0 : index
    %1 = vector.load %arg2[%c0_1, %c0_2] : memref<16x1xi32, #tpu.memory_space<vmem>>, vector<16x1xi32>
    %2 = tpu.iota {dimensions = array<i32: 1>} : vector<16x16xi32>
    %3 = vector.broadcast %0 : vector<16x1xi32> to vector<16x16xi32>
    %4 = arith.cmpi eq, %3, %2 : vector<16x16xi32>
    %5 = arith.extui %4 : vector<16x16xi1> to vector<16x16xi32>
    %6 = arith.sitofp %5 : vector<16x16xi32> to vector<16x16xf32>
    %7 = tpu.iota {dimensions = array<i32: 1>} : vector<16x24xi32>
    %8 = vector.broadcast %1 : vector<16x1xi32> to vector<16x24xi32>
    %9 = arith.cmpi eq, %8, %7 : vector<16x24xi32>
    %10 = arith.extui %9 : vector<16x24xi1> to vector<16x24xi32>
    %11 = arith.sitofp %10 : vector<16x24xi32> to vector<16x24xf32>
    %c0_3 = arith.constant 0 : index
    %c0_4 = arith.constant 0 : index
    %12 = vector.load %arg3[%c0_3, %c0_4] : memref<16x32xf32, #tpu.memory_space<vmem>>, vector<16x32xf32>
    %cst = arith.constant dense<0.000000e+00> : vector<16x32xf32>
    %13 = tpu.matmul %6, %12, %cst {dimension_numbers = #tpu.dot_dimension_numbers<[1], [0], [0], [1], [0, 0, 1, 1], [], []>} : vector<16x16xf32>, vector<16x32xf32>, vector<16x32xf32> -> vector<16x32xf32>
    %c0_5 = arith.constant 0 : index
    %c0_6 = arith.constant 0 : index
    %14 = vector.load %arg4[%c0_5, %c0_6] : memref<24x32xf32, #tpu.memory_space<vmem>>, vector<24x32xf32>
    %cst_7 = arith.constant dense<0.000000e+00> : vector<16x32xf32>
    %15 = tpu.matmul %11, %14, %cst_7 {dimension_numbers = #tpu.dot_dimension_numbers<[1], [0], [0], [1], [0, 0, 1, 1], [], []>} : vector<16x24xf32>, vector<24x32xf32>, vector<16x32xf32> -> vector<16x32xf32>
    %16 = arith.mulf %13, %15 : vector<16x32xf32>
    %c0_8 = arith.constant 0 : index
    %c0_9 = arith.constant 0 : index
    %17 = vector.load %arg5[%c0_8, %c0_9] : memref<16x32xf32, #tpu.memory_space<vmem>>, vector<16x32xf32>
    tpu.vector_store %arg5[%c0_8, %c0_9], %16 {strides = array<i32>} : memref<16x32xf32, #tpu.memory_space<vmem>>, vector<16x32xf32>,
    return
  }
  func.func @transform_0(%arg0: i32) -> (i32, i32) {
    %c0_i32 = arith.constant 0 : i32
    %c0_i32_0 = arith.constant 0 : i32
    return %arg0, %c0_i32 : i32, i32
  }
  func.func @transform_1(%arg0: i32) -> (i32, i32) {
    %c0_i32 = arith.constant 0 : i32
    %c0_i32_0 = arith.constant 0 : i32
    return %arg0, %c0_i32 : i32, i32
  }
  func.func @transform_2(%arg0: i32) -> (i32, i32) {
    %c0_i32 = arith.constant 0 : i32
    %c0_i32_0 = arith.constant 0 : i32
    %c0_i32_1 = arith.constant 0 : i32
    return %c0_i32, %c0_i32_0 : i32, i32
  }
  func.func @transform_3(%arg0: i32) -> (i32, i32) {
    %c0_i32 = arith.constant 0 : i32
    %c0_i32_0 = arith.constant 0 : i32
    %c0_i32_1 = arith.constant 0 : i32
    return %c0_i32, %c0_i32_0 : i32, i32
  }
  func.func @transform_4(%arg0: i32) -> (i32, i32) {
    %c0_i32 = arith.constant 0 : i32
    %c0_i32_0 = arith.constant 0 : i32
    return %arg0, %c0_i32 : i32, i32
  }
}

</mosaic_0001>

<llo_original>
// kernel: tpu_custom_call.1
$region0: #{tpu_custom_call.1}
  #allocation0 [shape = 'u32[]', space=smem, size = 0x4, offset = 0x4, fixed_abs, tag = 'smem constant byte address 0x4 - core index']
  #allocation1 [shape = 'u32[144,128]{1,0:T(1,128)}', space=vmem, size = 0x12000, scoped, tag = 'internal scratch']
  %s0 = inlined_call_operand.vmem [shape: s32[16,1], index: 0, kind: input, shape index: {}]
  %s1 = inlined_call_operand.vmem [shape: s32[16,1], index: 1, kind: input, shape index: {}]
  %s2 = inlined_call_operand.vmem [shape: f32[16,32], index: 2, kind: input, shape index: {}]
  %s3 = inlined_call_operand.vmem [shape: f32[24,32], index: 3, kind: input, shape index: {}]
  %s4 = inlined_call_operand.hbm [shape: f32[16,32], index: 4, kind: output, shape index: {}]
  %s5 = sld [smem:[#allocation0]]
  $region26: #{tpu_custom_call.1} parent=0
    _
  %s7 = ssub.s32 1, %s5
  %s8 = scalar_select 0, %s7, %s5
  $region1: #{tpu_custom_call.1} parent=0
    #allocation2 [shape = 'u8[8192]{0}', space=vmem, size = 0x2000, scoped, tag = 'output window, operand 0, single buffered']
    #allocation3 [shape = 's32[1]{0}', space=sflag, size = 0x4, scoped, tag = 'scoped memory for tpu_custom_call.1']
    %9 = vsyncpa [#allocation3], 0
    // Predicated region
    $region2: #{tpu_custom_call.1} parent=1 // pred_check
      _
    $region3: #{tpu_custom_call.1} parent=1 // pred_check_branch
      %11 = sbr.rel (0) target = $region5
    $region4: #{tpu_custom_call.1} parent=1 // pred_region
      _
    $region5: #{tpu_custom_call.1} parent=1 // pred_fallthru
      _
    // Predicated region
    $region6: #{tpu_custom_call.1} parent=1 // pred_check
      _
    $region7: #{tpu_custom_call.1} parent=1 // pred_check_branch
      %13 = sbr.rel (0) target = $region9
    $region8: #{tpu_custom_call.1} parent=1 // pred_region
      _
    $region9: #{tpu_custom_call.1} parent=1 // pred_fallthru
      _
    // Predicated region
    $region10: #{tpu_custom_call.1} parent=1 // pred_check
      _
    $region11: #{tpu_custom_call.1} parent=1 // pred_check_branch
      %15 = sbr.rel (0) target = $region13
    $region12: #{tpu_custom_call.1} parent=1 // pred_region
      _
    $region13: #{tpu_custom_call.1} parent=1 // pred_fallthru
      _
    // Predicated region
    $region14: #{tpu_custom_call.1} parent=1 // pred_check
      _
    $region15: #{tpu_custom_call.1} parent=1 // pred_check_branch
      %17 = sbr.rel (0) target = $region17
    $region16: #{tpu_custom_call.1} parent=1 // pred_region
      _
    $region17: #{tpu_custom_call.1} parent=1 // pred_fallthru
      _
    %v18 = vld [vmem:[%s0] sm:$0xff]
    %v19 = vld [vmem:[%s0 + $0x8] sm:$0xff]
    %v20 = vld [vmem:[%s1] sm:$0xff]
    %v21 = vld [vmem:[%s1 + $0x8] sm:$0xff]
    %v22 = vlaneseq
    %v23 = vand.u32 %v22, 127
    %24 = vset.pattern.permute.xlu0 0
    %25 = vperm.xlu0 %24, %v18
    %v26 = vpop.permute.xlu0 %25
    %27 = vset.pattern.permute.xlu0 0
    %28 = vperm.xlu0 %27, %v19
    %v29 = vpop.permute.xlu0 %28
    %vm30 = vcmp.eq.s32.totalorder %v26, %v23
    %vm31 = vcmp.eq.s32.totalorder %v29, %v23
    %v32 = vsel %vm30, 1, 0
    %v33 = vsel %vm31, 1, 0
    %v34 = vcvt.s32.f32 %v32
    %v35 = vcvt.s32.f32 %v33
    %36 = vset.pattern.permute.xlu0 0
    %37 = vperm.xlu0 %36, %v20
    %v38 = vpop.permute.xlu0 %37
    %39 = vset.pattern.permute.xlu0 0
    %40 = vperm.xlu0 %39, %v21
    %v41 = vpop.permute.xlu0 %40
    %vm42 = vcmp.eq.s32.totalorder %v38, %v23
    %vm43 = vcmp.eq.s32.totalorder %v41, %v23
    %v44 = vsel %vm42, 1, 0
    %v45 = vsel %vm43, 1, 0
    %v46 = vcvt.s32.f32 %v44
    %v47 = vcvt.s32.f32 %v45
    %v48 = vld [vmem:[%s2] sm:$0xff]
    %v49 = vld [vmem:[%s2 + $0x8] sm:$0xff]
    %vm50 = vcmask 130048
    %v52 = vsel %vm50, %v34, 0
    %v55 = vsel %vm50, %v35, 0
    %57 = vmatprep.subr.mxu0 0.0
    %58 = vmatpush1.msra.mxu0 %v48
    %59 = vmatprep.subr.mxu0 0.0
    %60 = vmatpush1.msra.mxu0 %v49
    %61 = vmatprep.subr.mxu0 0.0
    %62 = vmatpush1.msra.mxu0 0.0
    %63 = vmatprep.subr.mxu0 0.0
    %64 = vmatpush1.msra.mxu0 0.0
    %65 = vmatprep.subr.mxu0 0.0
    %66 = vmatpush1.msra.mxu0 0.0
    %67 = vmatprep.subr.mxu0 0.0
    %68 = vmatpush1.msra.mxu0 0.0
    %69 = vmatprep.subr.mxu0 0.0
    %70 = vmatpush1.msra.mxu0 0.0
    %71 = vmatprep.subr.mxu0 0.0
    %72 = vmatpush1.msra.mxu0 0.0
    %73 = vmatprep.subr.mxu0 0.0
    %74 = vmatpush1.msra.mxu0 0.0
    %75 = vmatprep.subr.mxu0 0.0
    %76 = vmatpush1.msra.mxu0 0.0
    %77 = vmatprep.subr.mxu0 0.0
    %78 = vmatpush1.msra.mxu0 0.0
    %79 = vmatprep.subr.mxu0 0.0
    %80 = vmatpush1.msra.mxu0 0.0
    %81 = vmatprep.subr.mxu0 0.0
    %82 = vmatpush1.msra.mxu0 0.0
    %83 = vmatprep.subr.mxu0 0.0
    %84 = vmatpush1.msra.mxu0 0.0
    %85 = vmatprep.subr.mxu0 0.0
    %86 = vmatpush1.msra.mxu0 0.0
    %87 = vmatprep.subr.mxu0 0.0
    %88 = vmatpush1.msra.mxu0 0.0
    %89 = vmatprep.subr.mxu0 0.0
    %90 = vmatpush1.msra.mxu0 0.0
    %91 = vmatprep.subr.mxu0 0.0
    %92 = vmatpush1.msra.mxu0 0.0
    %93 = vmatprep.subr.mxu0 0.0
    %94 = vmatpush1.msra.mxu0 0.0
    %95 = vmatprep.subr.mxu0 0.0
    %96 = vmatpush1.msra.mxu0 0.0
    %97 = vmatprep.subr.mxu0 0.0
    %98 = vmatpush1.msra.mxu0 0.0
    %99 = vmatprep.subr.mxu0 0.0
    %100 = vmatpush1.msra.mxu0 0.0
    %101 = vmatprep.subr.mxu0 0.0
    %102 = vmatpush1.msra.mxu0 0.0
    %103 = vmatprep.subr.mxu0 0.0
    %104 = vmatpush1.msra.mxu0 0.0
    %105 = vmatprep.subr.mxu0 0.0
    %106 = vmatpush1.msra.mxu0 0.0
    %107 = vmatprep.subr.mxu0 0.0
    %108 = vmatpush1.msra.mxu0 0.0
    %109 = vmatprep.subr.mxu0 0.0
    %110 = vmatpush1.msra.mxu0 0.0
    %111 = vmatprep.subr.mxu0 0.0
    %112 = vmatpush1.msra.mxu0 0.0
    %113 = vmatprep.subr.mxu0 0.0
    %114 = vmatpush1.msra.mxu0 0.0
    %115 = vmatprep.subr.mxu0 0.0
    %116 = vmatpush1.msra.mxu0 0.0
    %117 = vmatprep.subr.mxu0 0.0
    %118 = vmatpush1.msra.mxu0 0.0
    %119 = vmatprep.subr.mxu0 0.0
    %120 = vmatpush1.msra.mxu0 0.0
    %121 = vmatprep.mubr.f32.mxu0 0.0
    %122 = vmatmul.mubr.f32.gmra.mrb[0].mxu0 %v52
    %v123 = vpop.f32.mrb[0].mxu0
    %v124 = vadd.f32 0.0, %v123
    %v125 = vpop.f32.mrb[0].mxu0
    %126 = vmatprep.mubr.f32.mxu0 0.0
    %127 = vmatmul.mubr.f32.gmra.mrb[0].mxu0 %v55
    %v128 = vpop.f32.mrb[0].mxu0
    %v129 = vadd.f32 0.0, %v128
    %v130 = vpop.f32.mrb[0].mxu0
    %131 = vdwg.mxu0
    %v132 = vld [vmem:[%s3] sm:$0xff]
    %v133 = vld [vmem:[%s3 + $0x8] sm:$0xff]
    %v134 = vld [vmem:[%s3 + $0x10] sm:$0xff]
    %vm135 = vcmask 195584
    %v137 = vsel %vm135, %v46, 0
    %v140 = vsel %vm135, %v47, 0
    %142 = vmatprep.subr.mxu0 0.0
    %143 = vmatpush1.msra.mxu0 %v132
    %144 = vmatprep.subr.mxu0 0.0
    %145 = vmatpush1.msra.mxu0 %v133
    %146 = vmatprep.subr.mxu0 0.0
    %147 = vmatpush1.msra.mxu0 %v134
    %148 = vmatprep.subr.mxu0 0.0
    %149 = vmatpush1.msra.mxu0 0.0
    %150 = vmatprep.subr.mxu0 0.0
    %151 = vmatpush1.msra.mxu0 0.0
    %152 = vmatprep.subr.mxu0 0.0
    %153 = vmatpush1.msra.mxu0 0.0
    %154 = vmatprep.subr.mxu0 0.0
    %155 = vmatpush1.msra.mxu0 0.0
    %156 = vmatprep.subr.mxu0 0.0
    %157 = vmatpush1.msra.mxu0 0.0
    %158 = vmatprep.subr.mxu0 0.0
    %159 = vmatpush1.msra.mxu0 0.0
    %160 = vmatprep.subr.mxu0 0.0
    %161 = vmatpush1.msra.mxu0 0.0
    %162 = vmatprep.subr.mxu0 0.0
    %163 = vmatpush1.msra.mxu0 0.0
    %164 = vmatprep.subr.mxu0 0.0
    %165 = vmatpush1.msra.mxu0 0.0
    %166 = vmatprep.subr.mxu0 0.0
    %167 = vmatpush1.msra.mxu0 0.0
    %168 = vmatprep.subr.mxu0 0.0
    %169 = vmatpush1.msra.mxu0 0.0
    %170 = vmatprep.subr.mxu0 0.0
    %171 = vmatpush1.msra.mxu0 0.0
    %172 = vmatprep.subr.mxu0 0.0
    %173 = vmatpush1.msra.mxu0 0.0
    %174 = vmatprep.subr.mxu0 0.0
    %175 = vmatpush1.msra.mxu0 0.0
    %176 = vmatprep.subr.mxu0 0.0
    %177 = vmatpush1.msra.mxu0 0.0
    %178 = vmatprep.subr.mxu0 0.0
    %179 = vmatpush1.msra.mxu0 0.0
    %180 = vmatprep.subr.mxu0 0.0
    %181 = vmatpush1.msra.mxu0 0.0
    %182 = vmatprep.subr.mxu0 0.0
    %183 = vmatpush1.msra.mxu0 0.0
    %184 = vmatprep.subr.mxu0 0.0
    %185 = vmatpush1.msra.mxu0 0.0
    %186 = vmatprep.subr.mxu0 0.0
    %187 = vmatpush1.msra.mxu0 0.0
    %188 = vmatprep.subr.mxu0 0.0
    %189 = vmatpush1.msra.mxu0 0.0
    %190 = vmatprep.subr.mxu0 0.0
    %191 = vmatpush1.msra.mxu0 0.0
    %192 = vmatprep.subr.mxu0 0.0
    %193 = vmatpush1.msra.mxu0 0.0
    %194 = vmatprep.subr.mxu0 0.0
    %195 = vmatpush1.msra.mxu0 0.0
    %196 = vmatprep.subr.mxu0 0.0
    %197 = vmatpush1.msra.mxu0 0.0
    %198 = vmatprep.subr.mxu0 0.0
    %199 = vmatpush1.msra.mxu0 0.0
    %200 = vmatprep.subr.mxu0 0.0
    %201 = vmatpush1.msra.mxu0 0.0
    %202 = vmatprep.subr.mxu0 0.0
    %203 = vmatpush1.msra.mxu0 0.0
    %204 = vmatprep.subr.mxu0 0.0
    %205 = vmatpush1.msra.mxu0 0.0
    %206 = vmatprep.mubr.f32.mxu0 0.0
    %207 = vmatmul.mubr.f32.gmra.mrb[0].mxu0 %v137
    %v208 = vpop.f32.mrb[0].mxu0
    %v209 = vadd.f32 0.0, %v208
    %v210 = vpop.f32.mrb[0].mxu0
    %211 = vmatprep.mubr.f32.mxu0 0.0
    %212 = vmatmul.mubr.f32.gmra.mrb[0].mxu0 %v140
    %v213 = vpop.f32.mrb[0].mxu0
    %v214 = vadd.f32 0.0, %v213
    %v215 = vpop.f32.mrb[0].mxu0
    %216 = vdwg.mxu0
    %v217 = vmul.f32 %v124, %v209
    %v218 = vmul.f32 %v129, %v214
    %vm219 = vcmask 261120
    %220 = vst.msk [vmem:[#allocation2] sm:$0xff] %vm219, %v217
    %221 = vst.msk [vmem:[#allocation2 + $0x8] sm:$0xff] %vm219, %v218
    // Predicated region
    $region18: #{tpu_custom_call.1} parent=1 // pred_check
      _
    $region19: #{tpu_custom_call.1} parent=1 // pred_check_branch
      %223 = sbr.rel (0) target = $region21
    $region20: #{tpu_custom_call.1} parent=1 // pred_region
      %s225 = ssub.s32 256, 256
      %226 = vsyncadd [#allocation3], %s225
      %s227 = sshll.u32 [#allocation2], 4
      %s228 = int_to_ptr.vmem [resolvable:$true] %s227
      %233 = dma.vmem_to_hbm [thread:$0]  %s228, 256, %s4, [#allocation3], 128, 128, 8
    $region21: #{tpu_custom_call.1} parent=1 // pred_fallthru
      _
    // Predicated region
    $region22: #{tpu_custom_call.1} parent=1 // pred_check
      _
    $region23: #{tpu_custom_call.1} parent=1 // pred_check_branch
      %235 = sbr.rel (0) target = $region25
    $region24: #{tpu_custom_call.1} parent=1 // pred_region
      %236 = dma.done [#allocation3], 256
    $region25: #{tpu_custom_call.1} parent=1 // pred_fallthru
      _
    %237 = vsyncpa [#allocation3], 1

</llo_original>
